<compile_context>
chip_gen: v6e
topology: v6e:2x2x1
jax: 0.10.0
libtpu: 0.0.40
codegen_flags: <defaults>
</compile_context>

<pallas_src>
import functools

import jax
import jax.numpy as jnp
from jax import lax
from jax.experimental import pallas as pl
from jax.experimental.pallas import tpu as pltpu


def _witran_kernel(a_ref, wt_ref, out_ref, pre_ref, *, hidden, batch):
    """2-D PSGMU recurrence over T diagonals.

    a_ref   : (T*CB, I+1)     diagonally shifted inputs, last column = bias mask
    wt_ref  : (2H+I+1, 6H)    packed [W_hidden.T ; W_input.T ; bias]
    out_ref : (T, CB, 2H)     [h_row | h_col] at every step (pre-roll)
    pre_ref : (T*CB, 6H)      VMEM scratch: input-side gate pre-activations
    """
    H = hidden
    T, CB, _ = out_ref.shape

    # --- stage 1: all input-side gate pre-activations in one MXU matmul ---------
    # The augmented last input column (0/1 mask) times the appended bias row
    # implements the reference's masked bias add for free inside this dot.
    w_in = wt_ref[2 * H:, :]                                       # (I+1, 6H)
    pre_ref[...] = jnp.dot(a_ref[...], w_in,
                           preferred_element_type=jnp.float32)     # (T*CB, 6H)

    # --- stage 2: serial recurrence over the T diagonals -------------------------
    w_h = wt_ref[0:2 * H, :]                                       # (2H, 6H)

    def step(t, h):                                                # h: (CB, 2H)
        off = pl.multiple_of(t * CB, CB)
        gate = (jnp.dot(h, w_h, preferred_element_type=jnp.float32)
                + pre_ref[pl.ds(off, CB), :])                      # (CB, 6H)

        sig = jax.nn.sigmoid(gate[:, 0:4 * H])                     # EUP
        tg = jnp.tanh(gate[:, 4 * H:6 * H])                        # EUP
        u_r, o_r = sig[:, 0:H], sig[:, H:2 * H]
        u_c, o_c = sig[:, 2 * H:3 * H], sig[:, 3 * H:4 * H]
        in_r, in_c = tg[:, 0:H], tg[:, H:2 * H]

        h_row, h_col = h[:, 0:H], h[:, H:2 * H]
        h_row_new = jnp.tanh((1.0 - u_r) * h_row + u_r * in_r) * o_r
        h_col_new = jnp.tanh((1.0 - u_c) * h_col + u_c * in_c) * o_c

        # output of this diagonal (pre-roll), matches torch.cat([row, col], -1)
        out_ref[t] = jnp.concatenate([h_row_new, h_col_new], axis=-1)

        # roll the column hidden by `batch` rows for the next diagonal (XLU)
        return jnp.concatenate(
            [h_row_new, jnp.roll(h_col_new, batch, axis=0)], axis=-1)

    h0 = jnp.zeros((CB, 2 * H), jnp.float32)
    lax.fori_loop(0, T, step, h0, unroll=True)


@jax.jit
def witran_encoder_forward(inp, W, Bp):
    """WITRAN_2DPSGMU_Encoder.forward (flag == 1, num_layers == 1).

    inp : (batch, rows, cols, input_size)
    W   : (6H, 2H + input_size)   -- W_first_layer
    Bp  : (1, 6H)                 -- B (num_layers == 1)

    Returns (output_all_slice, hidden_col_all, hidden_row_all), matching PyTorch:
      output_all_slice : (cols*batch, rows+cols-1, 2H)
      hidden_col_all   : (batch, 1, rows, H)
      hidden_row_all   : (batch, 1, cols, H)
    """
    batch, R, C, I = inp.shape
    H = W.shape[0] // 6
    T = R + C - 1
    CB = C * batch

    # ---- layout prep (plain JAX, outside the kernel): diagonal "water2sea" shift
    x = jnp.transpose(inp, (2, 0, 1, 3))                       # (C, batch, R, I)
    x = jnp.pad(x, ((0, 0), (0, 0), (0, C - 1), (0, 0)))        # (C, batch, T, I)
    x = jax.vmap(lambda s, r: jnp.roll(s, r, axis=1))(x, jnp.arange(C))
    a = jnp.transpose(x, (2, 0, 1, 3)).reshape(T * CB, I)       # (T*CB, I)

    # bias mask: rows [0, batch*(t+1)) of diagonal t get the bias, only while t < C
    t_ids = jnp.arange(T)[:, None]                              # (T, 1)
    r_ids = jnp.arange(CB)[None, :]                             # (1, CB)
    bmask = ((r_ids < (t_ids + 1) * batch) & (t_ids < C)).astype(jnp.float32)
    a_aug = jnp.concatenate([a, bmask.reshape(T * CB, 1)], axis=-1)   # (T*CB, I+1)

    # pack [W_hidden.T ; W_input.T ; bias] -> single weight operand; the masked
    # bias rides along the stage-1 matmul through the augmented mask column.
    wt_aug = jnp.concatenate([jnp.transpose(W), Bp.reshape(1, 6 * H)], axis=0)

    kernel = functools.partial(_witran_kernel, hidden=H, batch=batch)

    flops = 2 * (T * CB) * (I + 1) * (6 * H) + 2 * (T * CB) * (2 * H) * (6 * H)
    transcendentals = T * CB * 8 * H
    bytes_accessed = 4 * (T * CB * (I + 1) + (2 * H + I + 1) * 6 * H
                          + T * CB * 2 * H)

    out = pl.pallas_call(
        kernel,
        out_shape=jax.ShapeDtypeStruct((T, CB, 2 * H), jnp.float32),
        in_specs=[pl.BlockSpec(memory_space=pltpu.VMEM)] * 2,
        out_specs=pl.BlockSpec(memory_space=pltpu.VMEM),
        scratch_shapes=[pltpu.VMEM((T * CB, 6 * H), jnp.float32)],
        cost_estimate=pl.CostEstimate(
            flops=flops,
            transcendentals=transcendentals,
            bytes_accessed=bytes_accessed),
    )(a_aug, wt_aug)                                             # (T, CB, 2H)

    # ---- gather final states (mirrors the PyTorch list bookkeeping) ----
    output_all = jnp.transpose(out, (1, 0, 2))                   # (C*batch, T, 2H)

    hidden_row_all = jnp.stack(
        [out[c + R - 1, c * batch:(c + 1) * batch, :H] for c in range(C)],
        axis=1).reshape(batch, 1, C, H)

    hidden_col_all = jnp.stack(
        [out[C - 1 + r, (C - 1) * batch:, H:] for r in range(R)],
        axis=1).reshape(batch, 1, R, H)

    # flag == 1 return ordering: (output, col hiddens, row hiddens)
    return output_all, hidden_col_all, hidden_row_all


def reference_forward(inp, W, Bp):
    """Plain-JAX transcription of the PyTorch forward (num_layers == 1, flag == 1)."""
    batch, R, C, I = inp.shape
    H = W.shape[0] // 6
    T = R + C - 1
    CB = C * batch

    x = jnp.transpose(inp, (2, 0, 1, 3))                         # (C, batch, R, I)
    it = jnp.zeros((C, batch, T, I), jnp.float32)
    for r in range(C):
        it = it.at[r, :, r:r + R, :].set(x[r])
    a = it.reshape(CB, T, I)

    h_row = jnp.zeros((CB, H), jnp.float32)
    h_col = jnp.zeros((CB, H), jnp.float32)
    b = Bp[0]
    outs, row_saves, col_saves = [], [], []
    for t in range(T):
        cat = jnp.concatenate([h_row, h_col, a[:, t, :]], axis=-1)
        gate = cat @ W.T
        if t < C:
            gate = gate.at[:batch * (t + 1), :].add(b)
        sig = jax.nn.sigmoid(gate[:, :4 * H])
        tg = jnp.tanh(gate[:, 4 * H:])
        u_r, o_r, u_c, o_c = jnp.split(sig, 4, axis=-1)
        in_r, in_c = jnp.split(tg, 2, axis=-1)
        h_row = jnp.tanh((1 - u_r) * h_row + u_r * in_r) * o_r
        h_col = jnp.tanh((1 - u_c) * h_col + u_c * in_c) * o_c
        outs.append(jnp.concatenate([h_row, h_col], axis=-1))
        if t >= R - 1:
            loc = t - R + 1
            row_saves.append(h_row[loc * batch:(loc + 1) * batch, :])
        if t >= C - 1:
            col_saves.append(h_col[(C - 1) * batch:, :])
        h_col = jnp.roll(h_col, batch, axis=0)

    output_all = jnp.stack(outs, axis=1)                          # (CB, T, 2H)
    hidden_row_all = jnp.stack(row_saves, axis=1).reshape(batch, 1, C, H)
    hidden_col_all = jnp.stack(col_saves, axis=1).reshape(batch, 1, R, H)
    return output_all, hidden_col_all, hidden_row_all


if __name__ == "__main__":
    # Small shapes consistent with the module:
    # input (batch, water_rows, water_cols, input_size), hidden_size multiple of 8.
    batch, R, C, I, H = 2, 3, 4, 8, 32

    key = jax.random.PRNGKey(0)
    k_in, k_w, k_b = jax.random.split(key, 3)
    inp = jax.random.normal(k_in, (batch, R, C, I), jnp.float32)

    stdv = 1.0 / (H ** 0.5)                                      # reset_parameters()
    W = jax.random.uniform(k_w, (6 * H, 2 * H + I), jnp.float32, -stdv, stdv)
    Bp = jax.random.uniform(k_b, (1, 6 * H), jnp.float32, -stdv, stdv)

    got = jax.block_until_ready(witran_encoder_forward(inp, W, Bp))
    ref = jax.block_until_ready(reference_forward(inp, W, Bp))

    out_all, h_col_all, h_row_all = got
    assert out_all.shape == (C * batch, R + C - 1, 2 * H), out_all.shape
    assert h_col_all.shape == (batch, 1, R, H), h_col_all.shape
    assert h_row_all.shape == (batch, 1, C, H), h_row_all.shape

    for g, r in zip(got, ref):
        assert bool(jnp.all(jnp.isfinite(g))), "non-finite output"
        err = float(jnp.max(jnp.abs(g - r)))
        assert err < 1e-4, f"mismatch vs reference: max abs err = {err}"

    print("KERNEL_OK")
</pallas_src>

<mosaic_0001>
module attributes {stable_mosaic.version = 11 : i64} {
  func.func @_witran_kernel(%arg0: memref<48x9xf32, #tpu.memory_space<vmem>>, %arg1: memref<73x192xf32, #tpu.memory_space<vmem>>, %arg2: memref<6x8x64xf32, #tpu.memory_space<vmem>>, %arg3: memref<48x192xf32, #tpu.memory_space<vmem>>) attributes {dimension_semantics = [], scalar_prefetch = 0 : i64, scratch_operands = 1 : i64, tpu.core_type = #tpu.core_type<tc>} {
    %c64 = arith.constant 64 : index
    %c0 = arith.constant 0 : index
    %0 = vector.load %arg1[%c64, %c0] : memref<73x192xf32, #tpu.memory_space<vmem>>, vector<9x192xf32>
    %c0_0 = arith.constant 0 : index
    %c0_1 = arith.constant 0 : index
    %1 = vector.load %arg0[%c0_0, %c0_1] : memref<48x9xf32, #tpu.memory_space<vmem>>, vector<48x9xf32>
    %cst = arith.constant dense<0.000000e+00> : vector<48x192xf32>
    %2 = tpu.matmul %1, %0, %cst {dimension_numbers = #tpu.dot_dimension_numbers<[1], [0], [0], [1], [0, 0, 1, 1], [], []>} : vector<48x9xf32>, vector<9x192xf32>, vector<48x192xf32> -> vector<48x192xf32>
    %c0_2 = arith.constant 0 : index
    %c0_3 = arith.constant 0 : index
    %3 = vector.load %arg3[%c0_2, %c0_3] : memref<48x192xf32, #tpu.memory_space<vmem>>, vector<48x192xf32>
    tpu.vector_store %arg3[%c0_2, %c0_3], %2 {strides = array<i32>} : memref<48x192xf32, #tpu.memory_space<vmem>>, vector<48x192xf32>,
    %c0_4 = arith.constant 0 : index
    %c0_5 = arith.constant 0 : index
    %4 = vector.load %arg1[%c0_4, %c0_5] : memref<73x192xf32, #tpu.memory_space<vmem>>, vector<64x192xf32>
    %cst_6 = arith.constant 0.000000e+00 : f32
    %5 = vector.broadcast %cst_6 : f32 to vector<8x64xf32>
    %c0_i32 = arith.constant 0 : i32
    %c8_i32 = arith.constant 8 : i32
    %6 = arith.muli %c0_i32, %c8_i32 : i32
    %7 = tpu.assume_multiple %6, 8 : i32
    %cst_7 = arith.constant dense<0.000000e+00> : vector<8x192xf32>
    %8 = tpu.matmul %5, %4, %cst_7 {dimension_numbers = #tpu.dot_dimension_numbers<[1], [0], [0], [1], [0, 0, 1, 1], [], []>} : vector<8x64xf32>, vector<64x192xf32>, vector<8x192xf32> -> vector<8x192xf32>
    %9 = arith.index_cast %7 : i32 to index
    %c0_8 = arith.constant 0 : index
    %10 = vector.load %arg3[%9, %c0_8] : memref<48x192xf32, #tpu.memory_space<vmem>>, vector<8x192xf32>
    %11 = arith.addf %8, %10 : vector<8x192xf32>
    %12 = vector.extract_strided_slice %11 {offsets = [0, 0], sizes = [8, 128], strides = [1, 1]} : vector<8x192xf32> to vector<8x128xf32>
    %13 = arith.negf %12 : vector<8x128xf32>
    %14 = math.exp %13 : vector<8x128xf32>
    %cst_9 = arith.constant 1.000000e+00 : f32
    %15 = vector.broadcast %cst_9 : f32 to vector<8x128xf32>
    %16 = arith.addf %15, %14 : vector<8x128xf32>
    %17 = arith.divf %15, %16 : vector<8x128xf32>
    %18 = vector.extract_strided_slice %11 {offsets = [0, 128], sizes = [8, 64], strides = [1, 1]} : vector<8x192xf32> to vector<8x64xf32>
    %19 = math.tanh %18 : vector<8x64xf32>
    %20 = vector.extract_strided_slice %17 {offsets = [0, 0], sizes = [8, 32], strides = [1, 1]} : vector<8x128xf32> to vector<8x32xf32>
    %21 = vector.extract_strided_slice %17 {offsets = [0, 32], sizes = [8, 32], strides = [1, 1]} : vector<8x128xf32> to vector<8x32xf32>
    %22 = vector.extract_strided_slice %17 {offsets = [0, 64], sizes = [8, 32], strides = [1, 1]} : vector<8x128xf32> to vector<8x32xf32>
    %23 = vector.extract_strided_slice %17 {offsets = [0, 96], sizes = [8, 32], strides = [1, 1]} : vector<8x128xf32> to vector<8x32xf32>
    %24 = vector.extract_strided_slice %19 {offsets = [0, 0], sizes = [8, 32], strides = [1, 1]} : vector<8x64xf32> to vector<8x32xf32>
    %25 = vector.extract_strided_slice %19 {offsets = [0, 32], sizes = [8, 32], strides = [1, 1]} : vector<8x64xf32> to vector<8x32xf32>
    %26 = vector.extract_strided_slice %5 {offsets = [0, 0], sizes = [8, 32], strides = [1, 1]} : vector<8x64xf32> to vector<8x32xf32>
    %27 = vector.extract_strided_slice %5 {offsets = [0, 32], sizes = [8, 32], strides = [1, 1]} : vector<8x64xf32> to vector<8x32xf32>
    %cst_10 = arith.constant 1.000000e+00 : f32
    %28 = vector.broadcast %cst_10 : f32 to vector<8x32xf32>
    %29 = arith.subf %28, %20 : vector<8x32xf32>
    %30 = arith.mulf %29, %26 : vector<8x32xf32>
    %31 = arith.mulf %20, %24 : vector<8x32xf32>
    %32 = arith.addf %30, %31 : vector<8x32xf32>
    %33 = math.tanh %32 : vector<8x32xf32>
    %34 = arith.mulf %33, %21 : vector<8x32xf32>
    %cst_11 = arith.constant 1.000000e+00 : f32
    %35 = vector.broadcast %cst_11 : f32 to vector<8x32xf32>
    %36 = arith.subf %35, %22 : vector<8x32xf32>
    %37 = arith.mulf %36, %27 : vector<8x32xf32>
    %38 = arith.mulf %22, %25 : vector<8x32xf32>
    %39 = arith.addf %37, %38 : vector<8x32xf32>
    %40 = math.tanh %39 : vector<8x32xf32>
    %41 = arith.mulf %40, %23 : vector<8x32xf32>
    %42 = tpu.concatenate %34, %41 in 1 : vector<8x32xf32>, vector<8x32xf32> -> vector<8x64xf32>
    %43 = arith.index_cast %c0_i32 : i32 to index
    %c0_12 = arith.constant 0 : index
    %c0_13 = arith.constant 0 : index
    %44 = vector.load %arg2[%43, %c0_12, %c0_13] : memref<6x8x64xf32, #tpu.memory_space<vmem>>, vector<1x8x64xf32>
    %45 = vector.shape_cast %44 : vector<1x8x64xf32> to vector<8x64xf32>
    %46 = vector.shape_cast %42 : vector<8x64xf32> to vector<1x8x64xf32>
    tpu.vector_store %arg2[%43, %c0_12, %c0_13], %46 {strides = array<i32>} : memref<6x8x64xf32, #tpu.memory_space<vmem>>, vector<1x8x64xf32>,
    %47 = vector.extract_strided_slice %41 {offsets = [6, 0], sizes = [2, 32], strides = [1, 1]} : vector<8x32xf32> to vector<2x32xf32>
    %48 = vector.extract_strided_slice %41 {offsets = [0, 0], sizes = [6, 32], strides = [1, 1]} : vector<8x32xf32> to vector<6x32xf32>
    %49 = tpu.concatenate %47, %48 in 0 : vector<2x32xf32>, vector<6x32xf32> -> vector<8x32xf32>
    %50 = tpu.concatenate %34, %49 in 1 : vector<8x32xf32>, vector<8x32xf32> -> vector<8x64xf32>
    %c1_i32 = arith.constant 1 : i32
    %c8_i32_14 = arith.constant 8 : i32
    %51 = arith.muli %c1_i32, %c8_i32_14 : i32
    %52 = tpu.assume_multiple %51, 8 : i32
    %cst_15 = arith.constant dense<0.000000e+00> : vector<8x192xf32>
    %53 = tpu.matmul %50, %4, %cst_15 {dimension_numbers = #tpu.dot_dimension_numbers<[1], [0], [0], [1], [0, 0, 1, 1], [], []>} : vector<8x64xf32>, vector<64x192xf32>, vector<8x192xf32> -> vector<8x192xf32>
    %54 = arith.index_cast %52 : i32 to index
    %c0_16 = arith.constant 0 : index
    %55 = vector.load %arg3[%54, %c0_16] : memref<48x192xf32, #tpu.memory_space<vmem>>, vector<8x192xf32>
    %56 = arith.addf %53, %55 : vector<8x192xf32>
    %57 = vector.extract_strided_slice %56 {offsets = [0, 0], sizes = [8, 128], strides = [1, 1]} : vector<8x192xf32> to vector<8x128xf32>
    %58 = arith.negf %57 : vector<8x128xf32>
    %59 = math.exp %58 : vector<8x128xf32>
    %cst_17 = arith.constant 1.000000e+00 : f32
    %60 = vector.broadcast %cst_17 : f32 to vector<8x128xf32>
    %61 = arith.addf %60, %59 : vector<8x128xf32>
    %62 = arith.divf %60, %61 : vector<8x128xf32>
    %63 = vector.extract_strided_slice %56 {offsets = [0, 128], sizes = [8, 64], strides = [1, 1]} : vector<8x192xf32> to vector<8x64xf32>
    %64 = math.tanh %63 : vector<8x64xf32>
    %65 = vector.extract_strided_slice %62 {offsets = [0, 0], sizes = [8, 32], strides = [1, 1]} : vector<8x128xf32> to vector<8x32xf32>
    %66 = vector.extract_strided_slice %62 {offsets = [0, 32], sizes = [8, 32], strides = [1, 1]} : vector<8x128xf32> to vector<8x32xf32>
    %67 = vector.extract_strided_slice %62 {offsets = [0, 64], sizes = [8, 32], strides = [1, 1]} : vector<8x128xf32> to vector<8x32xf32>
    %68 = vector.extract_strided_slice %62 {offsets = [0, 96], sizes = [8, 32], strides = [1, 1]} : vector<8x128xf32> to vector<8x32xf32>
    %69 = vector.extract_strided_slice %64 {offsets = [0, 0], sizes = [8, 32], strides = [1, 1]} : vector<8x64xf32> to vector<8x32xf32>
    %70 = vector.extract_strided_slice %64 {offsets = [0, 32], sizes = [8, 32], strides = [1, 1]} : vector<8x64xf32> to vector<8x32xf32>
    %71 = vector.extract_strided_slice %50 {offsets = [0, 0], sizes = [8, 32], strides = [1, 1]} : vector<8x64xf32> to vector<8x32xf32>
    %72 = vector.extract_strided_slice %50 {offsets = [0, 32], sizes = [8, 32], strides = [1, 1]} : vector<8x64xf32> to vector<8x32xf32>
    %cst_18 = arith.constant 1.000000e+00 : f32
    %73 = vector.broadcast %cst_18 : f32 to vector<8x32xf32>
    %74 = arith.subf %73, %65 : vector<8x32xf32>
    %75 = arith.mulf %74, %71 : vector<8x32xf32>
    %76 = arith.mulf %65, %69 : vector<8x32xf32>
    %77 = arith.addf %75, %76 : vector<8x32xf32>
    %78 = math.tanh %77 : vector<8x32xf32>
    %79 = arith.mulf %78, %66 : vector<8x32xf32>
    %cst_19 = arith.constant 1.000000e+00 : f32
    %80 = vector.broadcast %cst_19 : f32 to vector<8x32xf32>
    %81 = arith.subf %80, %67 : vector<8x32xf32>
    %82 = arith.mulf %81, %72 : vector<8x32xf32>
    %83 = arith.mulf %67, %70 : vector<8x32xf32>
    %84 = arith.addf %82, %83 : vector<8x32xf32>
    %85 = math.tanh %84 : vector<8x32xf32>
    %86 = arith.mulf %85, %68 : vector<8x32xf32>
    %87 = tpu.concatenate %79, %86 in 1 : vector<8x32xf32>, vector<8x32xf32> -> vector<8x64xf32>
    %88 = arith.index_cast %c1_i32 : i32 to index
    %c0_20 = arith.constant 0 : index
    %c0_21 = arith.constant 0 : index
    %89 = vector.load %arg2[%88, %c0_20, %c0_21] : memref<6x8x64xf32, #tpu.memory_space<vmem>>, vector<1x8x64xf32>
    %90 = vector.shape_cast %89 : vector<1x8x64xf32> to vector<8x64xf32>
    %91 = vector.shape_cast %87 : vector<8x64xf32> to vector<1x8x64xf32>
    tpu.vector_store %arg2[%88, %c0_20, %c0_21], %91 {strides = array<i32>} : memref<6x8x64xf32, #tpu.memory_space<vmem>>, vector<1x8x64xf32>,
    %92 = vector.extract_strided_slice %86 {offsets = [6, 0], sizes = [2, 32], strides = [1, 1]} : vector<8x32xf32> to vector<2x32xf32>
    %93 = vector.extract_strided_slice %86 {offsets = [0, 0], sizes = [6, 32], strides = [1, 1]} : vector<8x32xf32> to vector<6x32xf32>
    %94 = tpu.concatenate %92, %93 in 0 : vector<2x32xf32>, vector<6x32xf32> -> vector<8x32xf32>
    %95 = tpu.concatenate %79, %94 in 1 : vector<8x32xf32>, vector<8x32xf32> -> vector<8x64xf32>
    %c2_i32 = arith.constant 2 : i32
    %c8_i32_22 = arith.constant 8 : i32
    %96 = arith.muli %c2_i32, %c8_i32_22 : i32
    %97 = tpu.assume_multiple %96, 8 : i32
    %cst_23 = arith.constant dense<0.000000e+00> : vector<8x192xf32>
    %98 = tpu.matmul %95, %4, %cst_23 {dimension_numbers = #tpu.dot_dimension_numbers<[1], [0], [0], [1], [0, 0, 1, 1], [], []>} : vector<8x64xf32>, vector<64x192xf32>, vector<8x192xf32> -> vector<8x192xf32>
    %99 = arith.index_cast %97 : i32 to index
    %c0_24 = arith.constant 0 : index
    %100 = vector.load %arg3[%99, %c0_24] : memref<48x192xf32, #tpu.memory_space<vmem>>, vector<8x192xf32>
    %101 = arith.addf %98, %100 : vector<8x192xf32>
    %102 = vector.extract_strided_slice %101 {offsets = [0, 0], sizes = [8, 128], strides = [1, 1]} : vector<8x192xf32> to vector<8x128xf32>
    %103 = arith.negf %102 : vector<8x128xf32>
    %104 = math.exp %103 : vector<8x128xf32>
    %cst_25 = arith.constant 1.000000e+00 : f32
    %105 = vector.broadcast %cst_25 : f32 to vector<8x128xf32>
    %106 = arith.addf %105, %104 : vector<8x128xf32>
    %107 = arith.divf %105, %106 : vector<8x128xf32>
    %108 = vector.extract_strided_slice %101 {offsets = [0, 128], sizes = [8, 64], strides = [1, 1]} : vector<8x192xf32> to vector<8x64xf32>
    %109 = math.tanh %108 : vector<8x64xf32>
    %110 = vector.extract_strided_slice %107 {offsets = [0, 0], sizes = [8, 32], strides = [1, 1]} : vector<8x128xf32> to vector<8x32xf32>
    %111 = vector.extract_strided_slice %107 {offsets = [0, 32], sizes = [8, 32], strides = [1, 1]} : vector<8x128xf32> to vector<8x32xf32>
    %112 = vector.extract_strided_slice %107 {offsets = [0, 64], sizes = [8, 32], strides = [1, 1]} : vector<8x128xf32> to vector<8x32xf32>
    %113 = vector.extract_strided_slice %107 {offsets = [0, 96], sizes = [8, 32], strides = [1, 1]} : vector<8x128xf32> to vector<8x32xf32>
    %114 = vector.extract_strided_slice %109 {offsets = [0, 0], sizes = [8, 32], strides = [1, 1]} : vector<8x64xf32> to vector<8x32xf32>
    %115 = vector.extract_strided_slice %109 {offsets = [0, 32], sizes = [8, 32], strides = [1, 1]} : vector<8x64xf32> to vector<8x32xf32>
    %116 = vector.extract_strided_slice %95 {offsets = [0, 0], sizes = [8, 32], strides = [1, 1]} : vector<8x64xf32> to vector<8x32xf32>
    %117 = vector.extract_strided_slice %95 {offsets = [0, 32], sizes = [8, 32], strides = [1, 1]} : vector<8x64xf32> to vector<8x32xf32>
    %cst_26 = arith.constant 1.000000e+00 : f32
    %118 = vector.broadcast %cst_26 : f32 to vector<8x32xf32>
    %119 = arith.subf %118, %110 : vector<8x32xf32>
    %120 = arith.mulf %119, %116 : vector<8x32xf32>
    %121 = arith.mulf %110, %114 : vector<8x32xf32>
    %122 = arith.addf %120, %121 : vector<8x32xf32>
    %123 = math.tanh %122 : vector<8x32xf32>
    %124 = arith.mulf %123, %111 : vector<8x32xf32>
    %cst_27 = arith.constant 1.000000e+00 : f32
    %125 = vector.broadcast %cst_27 : f32 to vector<8x32xf32>
    %126 = arith.subf %125, %112 : vector<8x32xf32>
    %127 = arith.mulf %126, %117 : vector<8x32xf32>
    %128 = arith.mulf %112, %115 : vector<8x32xf32>
    %129 = arith.addf %127, %128 : vector<8x32xf32>
    %130 = math.tanh %129 : vector<8x32xf32>
    %131 = arith.mulf %130, %113 : vector<8x32xf32>
    %132 = tpu.concatenate %124, %131 in 1 : vector<8x32xf32>, vector<8x32xf32> -> vector<8x64xf32>
    %133 = arith.index_cast %c2_i32 : i32 to index
    %c0_28 = arith.constant 0 : index
    %c0_29 = arith.constant 0 : index
    %134 = vector.load %arg2[%133, %c0_28, %c0_29] : memref<6x8x64xf32, #tpu.memory_space<vmem>>, vector<1x8x64xf32>
    %135 = vector.shape_cast %134 : vector<1x8x64xf32> to vector<8x64xf32>
    %136 = vector.shape_cast %132 : vector<8x64xf32> to vector<1x8x64xf32>
    tpu.vector_store %arg2[%133, %c0_28, %c0_29], %136 {strides = array<i32>} : memref<6x8x64xf32, #tpu.memory_space<vmem>>, vector<1x8x64xf32>,
    %137 = vector.extract_strided_slice %131 {offsets = [6, 0], sizes = [2, 32], strides = [1, 1]} : vector<8x32xf32> to vector<2x32xf32>
    %138 = vector.extract_strided_slice %131 {offsets = [0, 0], sizes = [6, 32], strides = [1, 1]} : vector<8x32xf32> to vector<6x32xf32>
    %139 = tpu.concatenate %137, %138 in 0 : vector<2x32xf32>, vector<6x32xf32> -> vector<8x32xf32>
    %140 = tpu.concatenate %124, %139 in 1 : vector<8x32xf32>, vector<8x32xf32> -> vector<8x64xf32>
    %c3_i32 = arith.constant 3 : i32
    %c8_i32_30 = arith.constant 8 : i32
    %141 = arith.muli %c3_i32, %c8_i32_30 : i32
    %142 = tpu.assume_multiple %141, 8 : i32
    %cst_31 = arith.constant dense<0.000000e+00> : vector<8x192xf32>
    %143 = tpu.matmul %140, %4, %cst_31 {dimension_numbers = #tpu.dot_dimension_numbers<[1], [0], [0], [1], [0, 0, 1, 1], [], []>} : vector<8x64xf32>, vector<64x192xf32>, vector<8x192xf32> -> vector<8x192xf32>
    %144 = arith.index_cast %142 : i32 to index
    %c0_32 = arith.constant 0 : index
    %145 = vector.load %arg3[%144, %c0_32] : memref<48x192xf32, #tpu.memory_space<vmem>>, vector<8x192xf32>
    %146 = arith.addf %143, %145 : vector<8x192xf32>
    %147 = vector.extract_strided_slice %146 {offsets = [0, 0], sizes = [8, 128], strides = [1, 1]} : vector<8x192xf32> to vector<8x128xf32>
    %148 = arith.negf %147 : vector<8x128xf32>
    %149 = math.exp %148 : vector<8x128xf32>
    %cst_33 = arith.constant 1.000000e+00 : f32
    %150 = vector.broadcast %cst_33 : f32 to vector<8x128xf32>
    %151 = arith.addf %150, %149 : vector<8x128xf32>
    %152 = arith.divf %150, %151 : vector<8x128xf32>
    %153 = vector.extract_strided_slice %146 {offsets = [0, 128], sizes = [8, 64], strides = [1, 1]} : vector<8x192xf32> to vector<8x64xf32>
    %154 = math.tanh %153 : vector<8x64xf32>
    %155 = vector.extract_strided_slice %152 {offsets = [0, 0], sizes = [8, 32], strides = [1, 1]} : vector<8x128xf32> to vector<8x32xf32>
    %156 = vector.extract_strided_slice %152 {offsets = [0, 32], sizes = [8, 32], strides = [1, 1]} : vector<8x128xf32> to vector<8x32xf32>
    %157 = vector.extract_strided_slice %152 {offsets = [0, 64], sizes = [8, 32], strides = [1, 1]} : vector<8x128xf32> to vector<8x32xf32>
    %158 = vector.extract_strided_slice %152 {offsets = [0, 96], sizes = [8, 32], strides = [1, 1]} : vector<8x128xf32> to vector<8x32xf32>
    %159 = vector.extract_strided_slice %154 {offsets = [0, 0], sizes = [8, 32], strides = [1, 1]} : vector<8x64xf32> to vector<8x32xf32>
    %160 = vector.extract_strided_slice %154 {offsets = [0, 32], sizes = [8, 32], strides = [1, 1]} : vector<8x64xf32> to vector<8x32xf32>
    %161 = vector.extract_strided_slice %140 {offsets = [0, 0], sizes = [8, 32], strides = [1, 1]} : vector<8x64xf32> to vector<8x32xf32>
    %162 = vector.extract_strided_slice %140 {offsets = [0, 32], sizes = [8, 32], strides = [1, 1]} : vector<8x64xf32> to vector<8x32xf32>
    %cst_34 = arith.constant 1.000000e+00 : f32
    %163 = vector.broadcast %cst_34 : f32 to vector<8x32xf32>
    %164 = arith.subf %163, %155 : vector<8x32xf32>
    %165 = arith.mulf %164, %161 : vector<8x32xf32>
    %166 = arith.mulf %155, %159 : vector<8x32xf32>
    %167 = arith.addf %165, %166 : vector<8x32xf32>
    %168 = math.tanh %167 : vector<8x32xf32>
    %169 = arith.mulf %168, %156 : vector<8x32xf32>
    %cst_35 = arith.constant 1.000000e+00 : f32
    %170 = vector.broadcast %cst_35 : f32 to vector<8x32xf32>
    %171 = arith.subf %170, %157 : vector<8x32xf32>
    %172 = arith.mulf %171, %162 : vector<8x32xf32>
    %173 = arith.mulf %157, %160 : vector<8x32xf32>
    %174 = arith.addf %172, %173 : vector<8x32xf32>
    %175 = math.tanh %174 : vector<8x32xf32>
    %176 = arith.mulf %175, %158 : vector<8x32xf32>
    %177 = tpu.concatenate %169, %176 in 1 : vector<8x32xf32>, vector<8x32xf32> -> vector<8x64xf32>
    %178 = arith.index_cast %c3_i32 : i32 to index
    %c0_36 = arith.constant 0 : index
    %c0_37 = arith.constant 0 : index
    %179 = vector.load %arg2[%178, %c0_36, %c0_37] : memref<6x8x64xf32, #tpu.memory_space<vmem>>, vector<1x8x64xf32>
    %180 = vector.shape_cast %179 : vector<1x8x64xf32> to vector<8x64xf32>
    %181 = vector.shape_cast %177 : vector<8x64xf32> to vector<1x8x64xf32>
    tpu.vector_store %arg2[%178, %c0_36, %c0_37], %181 {strides = array<i32>} : memref<6x8x64xf32, #tpu.memory_space<vmem>>, vector<1x8x64xf32>,
    %182 = vector.extract_strided_slice %176 {offsets = [6, 0], sizes = [2, 32], strides = [1, 1]} : vector<8x32xf32> to vector<2x32xf32>
    %183 = vector.extract_strided_slice %176 {offsets = [0, 0], sizes = [6, 32], strides = [1, 1]} : vector<8x32xf32> to vector<6x32xf32>
    %184 = tpu.concatenate %182, %183 in 0 : vector<2x32xf32>, vector<6x32xf32> -> vector<8x32xf32>
    %185 = tpu.concatenate %169, %184 in 1 : vector<8x32xf32>, vector<8x32xf32> -> vector<8x64xf32>
    %c4_i32 = arith.constant 4 : i32
    %c8_i32_38 = arith.constant 8 : i32
    %186 = arith.muli %c4_i32, %c8_i32_38 : i32
    %187 = tpu.assume_multiple %186, 8 : i32
    %cst_39 = arith.constant dense<0.000000e+00> : vector<8x192xf32>
    %188 = tpu.matmul %185, %4, %cst_39 {dimension_numbers = #tpu.dot_dimension_numbers<[1], [0], [0], [1], [0, 0, 1, 1], [], []>} : vector<8x64xf32>, vector<64x192xf32>, vector<8x192xf32> -> vector<8x192xf32>
    %189 = arith.index_cast %187 : i32 to index
    %c0_40 = arith.constant 0 : index
    %190 = vector.load %arg3[%189, %c0_40] : memref<48x192xf32, #tpu.memory_space<vmem>>, vector<8x192xf32>
    %191 = arith.addf %188, %190 : vector<8x192xf32>
    %192 = vector.extract_strided_slice %191 {offsets = [0, 0], sizes = [8, 128], strides = [1, 1]} : vector<8x192xf32> to vector<8x128xf32>
    %193 = arith.negf %192 : vector<8x128xf32>
    %194 = math.exp %193 : vector<8x128xf32>
    %cst_41 = arith.constant 1.000000e+00 : f32
    %195 = vector.broadcast %cst_41 : f32 to vector<8x128xf32>
    %196 = arith.addf %195, %194 : vector<8x128xf32>
    %197 = arith.divf %195, %196 : vector<8x128xf32>
    %198 = vector.extract_strided_slice %191 {offsets = [0, 128], sizes = [8, 64], strides = [1, 1]} : vector<8x192xf32> to vector<8x64xf32>
    %199 = math.tanh %198 : vector<8x64xf32>
    %200 = vector.extract_strided_slice %197 {offsets = [0, 0], sizes = [8, 32], strides = [1, 1]} : vector<8x128xf32> to vector<8x32xf32>
    %201 = vector.extract_strided_slice %197 {offsets = [0, 32], sizes = [8, 32], strides = [1, 1]} : vector<8x128xf32> to vector<8x32xf32>
    %202 = vector.extract_strided_slice %197 {offsets = [0, 64], sizes = [8, 32], strides = [1, 1]} : vector<8x128xf32> to vector<8x32xf32>
    %203 = vector.extract_strided_slice %197 {offsets = [0, 96], sizes = [8, 32], strides = [1, 1]} : vector<8x128xf32> to vector<8x32xf32>
    %204 = vector.extract_strided_slice %199 {offsets = [0, 0], sizes = [8, 32], strides = [1, 1]} : vector<8x64xf32> to vector<8x32xf32>
    %205 = vector.extract_strided_slice %199 {offsets = [0, 32], sizes = [8, 32], strides = [1, 1]} : vector<8x64xf32> to vector<8x32xf32>
    %206 = vector.extract_strided_slice %185 {offsets = [0, 0], sizes = [8, 32], strides = [1, 1]} : vector<8x64xf32> to vector<8x32xf32>
    %207 = vector.extract_strided_slice %185 {offsets = [0, 32], sizes = [8, 32], strides = [1, 1]} : vector<8x64xf32> to vector<8x32xf32>
    %cst_42 = arith.constant 1.000000e+00 : f32
    %208 = vector.broadcast %cst_42 : f32 to vector<8x32xf32>
    %209 = arith.subf %208, %200 : vector<8x32xf32>
    %210 = arith.mulf %209, %206 : vector<8x32xf32>
    %211 = arith.mulf %200, %204 : vector<8x32xf32>
    %212 = arith.addf %210, %211 : vector<8x32xf32>
    %213 = math.tanh %212 : vector<8x32xf32>
    %214 = arith.mulf %213, %201 : vector<8x32xf32>
    %cst_43 = arith.constant 1.000000e+00 : f32
    %215 = vector.broadcast %cst_43 : f32 to vector<8x32xf32>
    %216 = arith.subf %215, %202 : vector<8x32xf32>
    %217 = arith.mulf %216, %207 : vector<8x32xf32>
    %218 = arith.mulf %202, %205 : vector<8x32xf32>
    %219 = arith.addf %217, %218 : vector<8x32xf32>
    %220 = math.tanh %219 : vector<8x32xf32>
    %221 = arith.mulf %220, %203 : vector<8x32xf32>
    %222 = tpu.concatenate %214, %221 in 1 : vector<8x32xf32>, vector<8x32xf32> -> vector<8x64xf32>
    %223 = arith.index_cast %c4_i32 : i32 to index
    %c0_44 = arith.constant 0 : index
    %c0_45 = arith.constant 0 : index
    %224 = vector.load %arg2[%223, %c0_44, %c0_45] : memref<6x8x64xf32, #tpu.memory_space<vmem>>, vector<1x8x64xf32>
    %225 = vector.shape_cast %224 : vector<1x8x64xf32> to vector<8x64xf32>
    %226 = vector.shape_cast %222 : vector<8x64xf32> to vector<1x8x64xf32>
    tpu.vector_store %arg2[%223, %c0_44, %c0_45], %226 {strides = array<i32>} : memref<6x8x64xf32, #tpu.memory_space<vmem>>, vector<1x8x64xf32>,
    %227 = vector.extract_strided_slice %221 {offsets = [6, 0], sizes = [2, 32], strides = [1, 1]} : vector<8x32xf32> to vector<2x32xf32>
    %228 = vector.extract_strided_slice %221 {offsets = [0, 0], sizes = [6, 32], strides = [1, 1]} : vector<8x32xf32> to vector<6x32xf32>
    %229 = tpu.concatenate %227, %228 in 0 : vector<2x32xf32>, vector<6x32xf32> -> vector<8x32xf32>
    %230 = tpu.concatenate %214, %229 in 1 : vector<8x32xf32>, vector<8x32xf32> -> vector<8x64xf32>
    %c5_i32 = arith.constant 5 : i32
    %c8_i32_46 = arith.constant 8 : i32
    %231 = arith.muli %c5_i32, %c8_i32_46 : i32
    %232 = tpu.assume_multiple %231, 8 : i32
    %cst_47 = arith.constant dense<0.000000e+00> : vector<8x192xf32>
    %233 = tpu.matmul %230, %4, %cst_47 {dimension_numbers = #tpu.dot_dimension_numbers<[1], [0], [0], [1], [0, 0, 1, 1], [], []>} : vector<8x64xf32>, vector<64x192xf32>, vector<8x192xf32> -> vector<8x192xf32>
    %234 = arith.index_cast %232 : i32 to index
    %c0_48 = arith.constant 0 : index
    %235 = vector.load %arg3[%234, %c0_48] : memref<48x192xf32, #tpu.memory_space<vmem>>, vector<8x192xf32>
    %236 = arith.addf %233, %235 : vector<8x192xf32>
    %237 = vector.extract_strided_slice %236 {offsets = [0, 0], sizes = [8, 128], strides = [1, 1]} : vector<8x192xf32> to vector<8x128xf32>
    %238 = arith.negf %237 : vector<8x128xf32>
    %239 = math.exp %238 : vector<8x128xf32>
    %cst_49 = arith.constant 1.000000e+00 : f32
    %240 = vector.broadcast %cst_49 : f32 to vector<8x128xf32>
    %241 = arith.addf %240, %239 : vector<8x128xf32>
    %242 = arith.divf %240, %241 : vector<8x128xf32>
    %243 = vector.extract_strided_slice %236 {offsets = [0, 128], sizes = [8, 64], strides = [1, 1]} : vector<8x192xf32> to vector<8x64xf32>
    %244 = math.tanh %243 : vector<8x64xf32>
    %245 = vector.extract_strided_slice %242 {offsets = [0, 0], sizes = [8, 32], strides = [1, 1]} : vector<8x128xf32> to vector<8x32xf32>
    %246 = vector.extract_strided_slice %242 {offsets = [0, 32], sizes = [8, 32], strides = [1, 1]} : vector<8x128xf32> to vector<8x32xf32>
    %247 = vector.extract_strided_slice %242 {offsets = [0, 64], sizes = [8, 32], strides = [1, 1]} : vector<8x128xf32> to vector<8x32xf32>
    %248 = vector.extract_strided_slice %242 {offsets = [0, 96], sizes = [8, 32], strides = [1, 1]} : vector<8x128xf32> to vector<8x32xf32>
    %249 = vector.extract_strided_slice %244 {offsets = [0, 0], sizes = [8, 32], strides = [1, 1]} : vector<8x64xf32> to vector<8x32xf32>
    %250 = vector.extract_strided_slice %244 {offsets = [0, 32], sizes = [8, 32], strides = [1, 1]} : vector<8x64xf32> to vector<8x32xf32>
    %251 = vector.extract_strided_slice %230 {offsets = [0, 0], sizes = [8, 32], strides = [1, 1]} : vector<8x64xf32> to vector<8x32xf32>
    %252 = vector.extract_strided_slice %230 {offsets = [0, 32], sizes = [8, 32], strides = [1, 1]} : vector<8x64xf32> to vector<8x32xf32>
    %cst_50 = arith.constant 1.000000e+00 : f32
    %253 = vector.broadcast %cst_50 : f32 to vector<8x32xf32>
    %254 = arith.subf %253, %245 : vector<8x32xf32>
    %255 = arith.mulf %254, %251 : vector<8x32xf32>
    %256 = arith.mulf %245, %249 : vector<8x32xf32>
    %257 = arith.addf %255, %256 : vector<8x32xf32>
    %258 = math.tanh %257 : vector<8x32xf32>
    %259 = arith.mulf %258, %246 : vector<8x32xf32>
    %cst_51 = arith.constant 1.000000e+00 : f32
    %260 = vector.broadcast %cst_51 : f32 to vector<8x32xf32>
    %261 = arith.subf %260, %247 : vector<8x32xf32>
    %262 = arith.mulf %261, %252 : vector<8x32xf32>
    %263 = arith.mulf %247, %250 : vector<8x32xf32>
    %264 = arith.addf %262, %263 : vector<8x32xf32>
    %265 = math.tanh %264 : vector<8x32xf32>
    %266 = arith.mulf %265, %248 : vector<8x32xf32>
    %267 = tpu.concatenate %259, %266 in 1 : vector<8x32xf32>, vector<8x32xf32> -> vector<8x64xf32>
    %268 = arith.index_cast %c5_i32 : i32 to index
    %c0_52 = arith.constant 0 : index
    %c0_53 = arith.constant 0 : index
    %269 = vector.load %arg2[%268, %c0_52, %c0_53] : memref<6x8x64xf32, #tpu.memory_space<vmem>>, vector<1x8x64xf32>
    %270 = vector.shape_cast %269 : vector<1x8x64xf32> to vector<8x64xf32>
    %271 = vector.shape_cast %267 : vector<8x64xf32> to vector<1x8x64xf32>
    tpu.vector_store %arg2[%268, %c0_52, %c0_53], %271 {strides = array<i32>} : memref<6x8x64xf32, #tpu.memory_space<vmem>>, vector<1x8x64xf32>,
    %272 = vector.extract_strided_slice %266 {offsets = [6, 0], sizes = [2, 32], strides = [1, 1]} : vector<8x32xf32> to vector<2x32xf32>
    %273 = vector.extract_strided_slice %266 {offsets = [0, 0], sizes = [6, 32], strides = [1, 1]} : vector<8x32xf32> to vector<6x32xf32>
    %274 = tpu.concatenate %272, %273 in 0 : vector<2x32xf32>, vector<6x32xf32> -> vector<8x32xf32>
    %275 = tpu.concatenate %259, %274 in 1 : vector<8x32xf32>, vector<8x32xf32> -> vector<8x64xf32>
    %c6_i32 = arith.constant 6 : i32
    return
  }
}

</mosaic_0001>

<llo_original>
// kernel: witran_encoder_forward.1
$region0: #{witran_encoder_forward.1}
  #allocation0 [shape = 'u32[]', space=smem, size = 0x4, offset = 0x4, fixed_abs, tag = 'smem constant byte address 0x4 - core index']
  #allocation1 [shape = 'u32[144,128]{1,0:T(1,128)}', space=vmem, size = 0x12000, scoped, tag = 'internal scratch']
  #allocation2 [shape = 'f32[48,192]{1,0:T(8,128)}', space=vmem, size = 0xc000, scoped, tag = 'scratch operand']
  %s0 = inlined_call_operand.vmem [shape: f32[48,9], index: 0, kind: input, shape index: {}]
  %s1 = inlined_call_operand.vmem [shape: f32[73,192], index: 1, kind: input, shape index: {}]
  %s2 = inlined_call_operand.vmem [shape: f32[6,8,64], index: 2, kind: output, shape index: {}]
  %s3 = sld [smem:[#allocation0]]
  $region18: #{witran_encoder_forward.1} parent=0
    _
  %s5 = ssub.s32 1, %s3
  %s6 = scalar_select 0, %s5, %s3
  // Predicated region
  $region2: #{witran_encoder_forward.1} parent=0 // pred_check
    _
  $region3: #{witran_encoder_forward.1} parent=0 // pred_check_branch
    %8 = sbr.rel (0) target = $region5
  $region4: #{witran_encoder_forward.1} parent=0 // pred_region
    _
  $region5: #{witran_encoder_forward.1} parent=0 // pred_fallthru
    _
  // Predicated region
  $region6: #{witran_encoder_forward.1} parent=0 // pred_check
    _
  $region7: #{witran_encoder_forward.1} parent=0 // pred_check_branch
    %10 = sbr.rel (0) target = $region9
  $region8: #{witran_encoder_forward.1} parent=0 // pred_region
    _
  $region9: #{witran_encoder_forward.1} parent=0 // pred_fallthru
    _
  %v11 = vld [vmem:[%s1 + $0x80] sm:$0xff]
  %v12 = vld [vmem:[%s1 + $0x88] sm:$0xff]
  %v13 = vld [vmem:[%s1 + $0x90] sm:$0x1]
  %v14 = vld [vmem:[%s1 + $0x98] sm:$0x1]
  %v15 = vld [vmem:[%s0] sm:$0xff]
  %v16 = vld [vmem:[%s0 + $0x8] sm:$0xff]
  %v17 = vld [vmem:[%s0 + $0x10] sm:$0xff]
  %v18 = vld [vmem:[%s0 + $0x18] sm:$0xff]
  %v19 = vld [vmem:[%s0 + $0x20] sm:$0xff]
  %v20 = vld [vmem:[%s0 + $0x28] sm:$0xff]
  %vm21 = vcmask 72704
  %v23 = vsel %vm21, %v15, 0
  %v26 = vsel %vm21, %v16, 0
  %v29 = vsel %vm21, %v17, 0
  %v32 = vsel %vm21, %v18, 0
  %v35 = vsel %vm21, %v19, 0
  %v38 = vsel %vm21, %v20, 0
  %vm40 = vcmask 1040384
  %v42 = vsel %vm40, %v13, 0
  %v45 = vsel %vm40, %v14, 0
  %47 = vmatprep.subr.mxu0 0.0
  %48 = vmatpush1.msra.mxu0 0.0
  %49 = vmatprep.subr.mxu0 0.0
  %50 = vmatpush1.msra.mxu0 0.0
  %51 = vmatprep.subr.mxu0 0.0
  %52 = vmatpush1.msra.mxu0 0.0
  %53 = vmatprep.subr.mxu0 0.0
  %54 = vmatpush1.msra.mxu0 0.0
  %55 = vmatprep.subr.mxu0 0.0
  %56 = vmatpush1.msra.mxu0 0.0
  %57 = vmatprep.subr.mxu0 0.0
  %58 = vmatpush1.msra.mxu0 0.0
  %59 = vmatprep.subr.mxu0 0.0
  %60 = vmatpush1.msra.mxu0 0.0
  %61 = vmatprep.subr.mxu0 0.0
  %62 = vmatpush1.msra.mxu0 0.0
  %63 = vmatprep.subr.mxu0 0.0
  %64 = vmatpush1.msra.mxu0 0.0
  %65 = vmatprep.subr.mxu0 0.0
  %66 = vmatpush1.msra.mxu0 0.0
  %67 = vmatprep.subr.mxu0 0.0
  %68 = vmatpush1.msra.mxu0 0.0
  %69 = vmatprep.subr.mxu0 0.0
  %70 = vmatpush1.msra.mxu0 0.0
  %71 = vmatprep.subr.mxu0 0.0
  %72 = vmatpush1.msra.mxu0 0.0
  %73 = vmatprep.subr.mxu0 0.0
  %74 = vmatpush1.msra.mxu0 0.0
  %75 = vmatprep.subr.mxu0 %v45
  %76 = vmatpush1.msra.mxu0 %v42
  %77 = vmatprep.subr.mxu0 %v12
  %78 = vmatpush1.msra.mxu0 %v11
  %79 = vmatprep.subr.mxu0 0.0
  %80 = vmatpush2.msra.mxu0 0.0
  %81 = vmatprep.subr.mxu0 0.0
  %82 = vmatpush2.msra.mxu0 0.0
  %83 = vmatprep.subr.mxu0 0.0
  %84 = vmatpush2.msra.mxu0 0.0
  %85 = vmatprep.subr.mxu0 0.0
  %86 = vmatpush2.msra.mxu0 0.0
  %87 = vmatprep.subr.mxu0 0.0
  %88 = vmatpush2.msra.mxu0 0.0
  %89 = vmatprep.subr.mxu0 0.0
  %90 = vmatpush2.msra.mxu0 0.0
  %91 = vmatprep.subr.mxu0 0.0
  %92 = vmatpush2.msra.mxu0 0.0
  %93 = vmatprep.subr.mxu0 0.0
  %94 = vmatpush2.msra.mxu0 0.0
  %95 = vmatprep.subr.mxu0 0.0
  %96 = vmatpush2.msra.mxu0 0.0
  %97 = vmatprep.subr.mxu0 0.0
  %98 = vmatpush2.msra.mxu0 0.0
  %99 = vmatprep.subr.mxu0 0.0
  %100 = vmatpush2.msra.mxu0 0.0
  %101 = vmatprep.subr.mxu0 0.0
  %102 = vmatpush2.msra.mxu0 0.0
  %103 = vmatprep.subr.mxu0 0.0
  %104 = vmatpush2.msra.mxu0 0.0
  %105 = vmatprep.subr.mxu0 0.0
  %106 = vmatpush2.msra.mxu0 0.0
  %107 = vmatprep.subr.mxu0 0.0
  %108 = vmatpush2.msra.mxu0 0.0
  %109 = vmatprep.subr.mxu0 0.0
  %110 = vmatpush2.msra.mxu0 0.0
  %111 = vmatprep.mubr.f32.mxu0 0.0
  %112 = vmatmul.mubr.f32.gmra.mxu0 %v23
  %v113 = vpop.f32.mrf.mxu0
  %v114 = vadd.f32 0.0, %v113
  %v115 = vpop.f32.mrf.mxu0
  %v116 = vadd.f32 0.0, %v115
  %117 = vmatprep.mubr.f32.mxu0 0.0
  %118 = vmatmul.mubr.f32.gmra.mxu0 %v26
  %v119 = vpop.f32.mrf.mxu0
  %v120 = vadd.f32 0.0, %v119
  %v121 = vpop.f32.mrf.mxu0
  %v122 = vadd.f32 0.0, %v121
  %123 = vmatprep.mubr.f32.mxu0 0.0
  %124 = vmatmul.mubr.f32.gmra.mxu0 %v29
  %v125 = vpop.f32.mrf.mxu0
  %v126 = vadd.f32 0.0, %v125
  %v127 = vpop.f32.mrf.mxu0
  %v128 = vadd.f32 0.0, %v127
  %129 = vmatprep.mubr.f32.mxu0 0.0
  %130 = vmatmul.mubr.f32.gmra.mxu0 %v32
  %v131 = vpop.f32.mrf.mxu0
  %v132 = vadd.f32 0.0, %v131
  %v133 = vpop.f32.mrf.mxu0
  %v134 = vadd.f32 0.0, %v133
  %135 = vmatprep.mubr.f32.mxu0 0.0
  %136 = vmatmul.mubr.f32.gmra.mxu0 %v35
  %v137 = vpop.f32.mrf.mxu0
  %v138 = vadd.f32 0.0, %v137
  %v139 = vpop.f32.mrf.mxu0
  %v140 = vadd.f32 0.0, %v139
  %141 = vmatprep.mubr.f32.mxu0 0.0
  %142 = vmatmul.mubr.f32.gmra.mxu0 %v38
  %v143 = vpop.f32.mrf.mxu0
  %v144 = vadd.f32 0.0, %v143
  %v145 = vpop.f32.mrf.mxu0
  %v146 = vadd.f32 0.0, %v145
  %147 = vdwg.mxu0
  %148 = vst [vmem:[#allocation2] sm:$0xff] %v114
  %vm149 = vcmask 523264
  %150 = vst.msk [vmem:[#allocation2 + $0x8] sm:$0xff] %vm149, %v116
  %151 = vst [vmem:[#allocation2 + $0x10] sm:$0xff] %v120
  %152 = vst.msk [vmem:[#allocation2 + $0x18] sm:$0xff] %vm149, %v122
  %153 = vst [vmem:[#allocation2 + $0x20] sm:$0xff] %v126
  %154 = vst.msk [vmem:[#allocation2 + $0x28] sm:$0xff] %vm149, %v128
  %155 = vst [vmem:[#allocation2 + $0x30] sm:$0xff] %v132
  %156 = vst.msk [vmem:[#allocation2 + $0x38] sm:$0xff] %vm149, %v134
  %157 = vst [vmem:[#allocation2 + $0x40] sm:$0xff] %v138
  %158 = vst.msk [vmem:[#allocation2 + $0x48] sm:$0xff] %vm149, %v140
  %159 = vst [vmem:[#allocation2 + $0x50] sm:$0xff] %v144
  %160 = vst.msk [vmem:[#allocation2 + $0x58] sm:$0xff] %vm149, %v146
  %v161 = vld [vmem:[%s1] sm:$0xff]
  %v162 = vld [vmem:[%s1 + $0x8] sm:$0xff]
  %v163 = vld [vmem:[%s1 + $0x10] sm:$0xff]
  %v164 = vld [vmem:[%s1 + $0x18] sm:$0xff]
  %v165 = vld [vmem:[%s1 + $0x20] sm:$0xff]
  %v166 = vld [vmem:[%s1 + $0x28] sm:$0xff]
  %v167 = vld [vmem:[%s1 + $0x30] sm:$0xff]
  %v168 = vld [vmem:[%s1 + $0x38] sm:$0xff]
  %v169 = vld [vmem:[%s1 + $0x40] sm:$0xff]
  %v170 = vld [vmem:[%s1 + $0x48] sm:$0xff]
  %v171 = vld [vmem:[%s1 + $0x50] sm:$0xff]
  %v172 = vld [vmem:[%s1 + $0x58] sm:$0xff]
  %v173 = vld [vmem:[%s1 + $0x60] sm:$0xff]
  %v174 = vld [vmem:[%s1 + $0x68] sm:$0xff]
  %v175 = vld [vmem:[%s1 + $0x70] sm:$0xff]
  %v176 = vld [vmem:[%s1 + $0x78] sm:$0xff]
  %s177 = smul.u32 0, 2
  %s178 = smul.addr %s177, 8
  %s179 = scalar_lea.vmem [#allocation2], %s178
  %v180 = vld [vmem:[%s179] sm:$0xff]
  %v181 = vld [vmem:[%s179 + $0x8] sm:$0xff]
  %v183 = vsel %vm149, 0.0, 0
  %185 = vmatprep.subr.mxu0 0.0
  %186 = vmatpush1.msra.mxu0 0.0
  %187 = vmatprep.subr.mxu0 0.0
  %188 = vmatpush1.msra.mxu0 0.0
  %189 = vmatprep.subr.mxu0 0.0
  %190 = vmatpush1.msra.mxu0 0.0
  %191 = vmatprep.subr.mxu0 0.0
  %192 = vmatpush1.msra.mxu0 0.0
  %193 = vmatprep.subr.mxu0 0.0
  %194 = vmatpush1.msra.mxu0 0.0
  %195 = vmatprep.subr.mxu0 0.0
  %196 = vmatpush1.msra.mxu0 0.0
  %197 = vmatprep.subr.mxu0 0.0
  %198 = vmatpush1.msra.mxu0 0.0
  %199 = vmatprep.subr.mxu0 0.0
  %200 = vmatpush1.msra.mxu0 0.0
  %201 = vmatprep.subr.mxu0 %v176
  %202 = vmatpush1.msra.mxu0 %v175
  %203 = vmatprep.subr.mxu0 %v174
  %204 = vmatpush1.msra.mxu0 %v173
  %205 = vmatprep.subr.mxu0 %v172
  %206 = vmatpush1.msra.mxu0 %v171
  %207 = vmatprep.subr.mxu0 %v170
  %208 = vmatpush1.msra.mxu0 %v169
  %209 = vmatprep.subr.mxu0 %v168
  %210 = vmatpush1.msra.mxu0 %v167
  %211 = vmatprep.subr.mxu0 %v166
  %212 = vmatpush1.msra.mxu0 %v165
  %213 = vmatprep.subr.mxu0 %v164
  %214 = vmatpush1.msra.mxu0 %v163
  %215 = vmatprep.subr.mxu0 %v162
  %216 = vmatpush1.msra.mxu0 %v161
  %217 = vmatprep.subr.mxu0 0.0
  %218 = vmatpush2.msra.mxu0 0.0
  %219 = vmatprep.subr.mxu0 0.0
  %220 = vmatpush2.msra.mxu0 0.0
  %221 = vmatprep.subr.mxu0 0.0
  %222 = vmatpush2.msra.mxu0 0.0
  %223 = vmatprep.subr.mxu0 0.0
  %224 = vmatpush2.msra.mxu0 0.0
  %225 = vmatprep.subr.mxu0 0.0
  %226 = vmatpush2.msra.mxu0 0.0
  %227 = vmatprep.subr.mxu0 0.0
  %228 = vmatpush2.msra.mxu0 0.0
  %229 = vmatprep.subr.mxu0 0.0
  %230 = vmatpush2.msra.mxu0 0.0
  %231 = vmatprep.subr.mxu0 0.0
  %232 = vmatpush2.msra.mxu0 0.0
  %233 = vmatprep.subr.mxu0 0.0
  %234 = vmatpush2.msra.mxu0 0.0
  %235 = vmatprep.subr.mxu0 0.0
  %236 = vmatpush2.msra.mxu0 0.0
  %237 = vmatprep.subr.mxu0 0.0
  %238 = vmatpush2.msra.mxu0 0.0
  %239 = vmatprep.subr.mxu0 0.0
  %240 = vmatpush2.msra.mxu0 0.0
  %241 = vmatprep.subr.mxu0 0.0
  %242 = vmatpush2.msra.mxu0 0.0
  %243 = vmatprep.subr.mxu0 0.0
  %244 = vmatpush2.msra.mxu0 0.0
  %245 = vmatprep.subr.mxu0 0.0
  %246 = vmatpush2.msra.mxu0 0.0
  %247 = vmatprep.subr.mxu0 0.0
  %248 = vmatpush2.msra.mxu0 0.0
  %249 = vmatprep.mubr.f32.mxu0 0.0
  %250 = vmatmul.mubr.f32.gmra.mxu0 %v183
  %v251 = vpop.f32.mrf.mxu0
  %v252 = vadd.f32 %v180, %v251
  %v253 = vpop.f32.mrf.mxu0
  %v254 = vadd.f32 %v181, %v253
  %255 = vdwg.mxu0
  %v256 = vxor.u32 %v252, 2147483648
  %v257 = vmul.f32 %v256, 1.442695
  %v258 = vpow.pop %v257
  %v259 = vadd.f32 %v258, 1.0
  %v260 = vrcp.pop %v259
  %v261 = vmul.f32 1.0, %v260
  %v262 = vtanh.pop %v254
  %v263 = vsub.f32 1.0, %v261
  %v264 = vmul.f32 %v263, 0.0
  %v265 = vmul.f32 %v261, %v262
  %v266 = vadd.f32 %v264, %v265
  %v267 = vtanh.pop %v266
  %269 = vrot.lane.b32.xlu0 %v261, 96
  %v270 = vpop.permute.xlu0 %269
  %v272 = vmul.f32 %v267, %v270
  %274 = vrot.lane.b32.xlu0 %v262, 32
  %v275 = vpop.permute.xlu0 %274
  %v277 = vmul.f32 %v261, %v275
  %v278 = vadd.f32 %v264, %v277
  %v279 = vtanh.pop %v278
  %v280 = vmul.f32 %v279, %v270
  %282 = vrot.lane.b32.xlu0 %v280, 96
  %v283 = vpop.permute.xlu0 %282
  %vm285 = vcmask 261120
  %v286 = vsel %vm285, %v272, %v283
  %287 = vst.msk [vmem:[%s2] sm:$0xff] %vm149, %v286
  %v288 = vrot.slane %v280, 6
  %vm290 = vcmask 1041408
  %v291 = vsel %vm290, %v288, %v288
  %293 = vrot.lane.b32.xlu0 %v291, 96
  %v294 = vpop.permute.xlu0 %293
  %v296 = vsel %vm285, %v272, %v294
  %s297 = smul.u32 1, 2
  %s298 = smul.addr %s297, 8
  %s299 = scalar_lea.vmem [#allocation2], %s298
  %v300 = vld [vmem:[%s299] sm:$0xff]
  %v301 = vld [vmem:[%s299 + $0x8] sm:$0xff]
  %v303 = vsel %vm149, %v296, 0
  %305 = vmatprep.subr.mxu0 0.0
  %306 = vmatpush1.msra.mxu0 0.0
  %307 = vmatprep.subr.mxu0 0.0
  %308 = vmatpush1.msra.mxu0 0.0
  %309 = vmatprep.subr.mxu0 0.0
  %310 = vmatpush1.msra.mxu0 0.0
  %311 = vmatprep.subr.mxu0 0.0
  %312 = vmatpush1.msra.mxu0 0.0
  %313 = vmatprep.subr.mxu0 0.0
  %314 = vmatpush1.msra.mxu0 0.0
  %315 = vmatprep.subr.mxu0 0.0
  %316 = vmatpush1.msra.mxu0 0.0
  %317 = vmatprep.subr.mxu0 0.0
  %318 = vmatpush1.msra.mxu0 0.0
  %319 = vmatprep.subr.mxu0 0.0
  %320 = vmatpush1.msra.mxu0 0.0
  %321 = vmatprep.subr.mxu0 %v176
  %322 = vmatpush1.msra.mxu0 %v175
  %323 = vmatprep.subr.mxu0 %v174
  %324 = vmatpush1.msra.mxu0 %v173
  %325 = vmatprep.subr.mxu0 %v172
  %326 = vmatpush1.msra.mxu0 %v171
  %327 = vmatprep.subr.mxu0 %v170
  %328 = vmatpush1.msra.mxu0 %v169
  %329 = vmatprep.subr.mxu0 %v168
  %330 = vmatpush1.msra.mxu0 %v167
  %331 = vmatprep.subr.mxu0 %v166
  %332 = vmatpush1.msra.mxu0 %v165
  %333 = vmatprep.subr.mxu0 %v164
  %334 = vmatpush1.msra.mxu0 %v163
  %335 = vmatprep.subr.mxu0 %v162
  %336 = vmatpush1.msra.mxu0 %v161
  %337 = vmatprep.subr.mxu0 0.0
  %338 = vmatpush2.msra.mxu0 0.0
  %339 = vmatprep.subr.mxu0 0.0
  %340 = vmatpush2.msra.mxu0 0.0
  %341 = vmatprep.subr.mxu0 0.0
  %342 = vmatpush2.msra.mxu0 0.0
  %343 = vmatprep.subr.mxu0 0.0
  %344 = vmatpush2.msra.mxu0 0.0
  %345 = vmatprep.subr.mxu0 0.0
  %346 = vmatpush2.msra.mxu0 0.0
  %347 = vmatprep.subr.mxu0 0.0
  %348 = vmatpush2.msra.mxu0 0.0
  %349 = vmatprep.subr.mxu0 0.0
  %350 = vmatpush2.msra.mxu0 0.0
  %351 = vmatprep.subr.mxu0 0.0
  %352 = vmatpush2.msra.mxu0 0.0
  %353 = vmatprep.subr.mxu0 0.0
  %354 = vmatpush2.msra.mxu0 0.0
  %355 = vmatprep.subr.mxu0 0.0
  %356 = vmatpush2.msra.mxu0 0.0
  %357 = vmatprep.subr.mxu0 0.0
  %358 = vmatpush2.msra.mxu0 0.0
  %359 = vmatprep.subr.mxu0 0.0
  %360 = vmatpush2.msra.mxu0 0.0
  %361 = vmatprep.subr.mxu0 0.0
  %362 = vmatpush2.msra.mxu0 0.0
  %363 = vmatprep.subr.mxu0 0.0
  %364 = vmatpush2.msra.mxu0 0.0
  %365 = vmatprep.subr.mxu0 0.0
  %366 = vmatpush2.msra.mxu0 0.0
  %367 = vmatprep.subr.mxu0 0.0
  %368 = vmatpush2.msra.mxu0 0.0
  %369 = vmatprep.mubr.f32.mxu0 0.0
  %370 = vmatmul.mubr.f32.gmra.mxu0 %v303
  %v371 = vpop.f32.mrf.mxu0
  %v372 = vadd.f32 %v300, %v371
  %v373 = vpop.f32.mrf.mxu0
  %v374 = vadd.f32 %v301, %v373
  %375 = vdwg.mxu0
  %v376 = vxor.u32 %v372, 2147483648
  %v377 = vmul.f32 %v376, 1.442695
  %v378 = vpow.pop %v377
  %v379 = vadd.f32 %v378, 1.0
  %v380 = vrcp.pop %v379
  %v381 = vmul.f32 1.0, %v380
  %v382 = vtanh.pop %v374
  %v383 = vsub.f32 1.0, %v381
  %v384 = vmul.f32 %v383, %v296
  %v385 = vmul.f32 %v381, %v382
  %v386 = vadd.f32 %v384, %v385
  %v387 = vtanh.pop %v386
  %389 = vrot.lane.b32.xlu0 %v381, 96
  %v390 = vpop.permute.xlu0 %389
  %v392 = vmul.f32 %v387, %v390
  %393 = vrot.lane.b32.xlu0 %v296, 32
  %v394 = vpop.permute.xlu0 %393
  %v396 = vmul.f32 %v383, %v394
  %398 = vrot.lane.b32.xlu0 %v382, 32
  %v399 = vpop.permute.xlu0 %398
  %v401 = vmul.f32 %v381, %v399
  %v402 = vadd.f32 %v396, %v401
  %v403 = vtanh.pop %v402
  %v404 = vmul.f32 %v403, %v390
  %406 = vrot.lane.b32.xlu0 %v404, 96
  %v407 = vpop.permute.xlu0 %406
  %v409 = vsel %vm285, %v392, %v407
  %s410 = scalar_lea.vmem %s2, 8
  %411 = vst.msk [vmem:[%s410] sm:$0xff] %vm149, %v409
  %v412 = vrot.slane %v404, 6
  %v414 = vsel %vm290, %v412, %v412
  %416 = vrot.lane.b32.xlu0 %v414, 96
  %v417 = vpop.permute.xlu0 %416
  %v419 = vsel %vm285, %v392, %v417
  %s420 = smul.u32 2, 2
  %s421 = smul.addr %s420, 8
  %s422 = scalar_lea.vmem [#allocation2], %s421
  %v423 = vld [vmem:[%s422] sm:$0xff]
  %v424 = vld [vmem:[%s422 + $0x8] sm:$0xff]
  %v426 = vsel %vm149, %v419, 0
  %428 = vmatprep.subr.mxu0 0.0
  %429 = vmatpush1.msra.mxu0 0.0
  %430 = vmatprep.subr.mxu0 0.0
  %431 = vmatpush1.msra.mxu0 0.0
  %432 = vmatprep.subr.mxu0 0.0
  %433 = vmatpush1.msra.mxu0 0.0
  %434 = vmatprep.subr.mxu0 0.0
  %435 = vmatpush1.msra.mxu0 0.0
  %436 = vmatprep.subr.mxu0 0.0
  %437 = vmatpush1.msra.mxu0 0.0
  %438 = vmatprep.subr.mxu0 0.0
  %439 = vmatpush1.msra.mxu0 0.0
  %440 = vmatprep.subr.mxu0 0.0
  %441 = vmatpush1.msra.mxu0 0.0
  %442 = vmatprep.subr.mxu0 0.0
  %443 = vmatpush1.msra.mxu0 0.0
  %444 = vmatprep.subr.mxu0 %v176
  %445 = vmatpush1.msra.mxu0 %v175
  %446 = vmatprep.subr.mxu0 %v174
  %447 = vmatpush1.msra.mxu0 %v173
  %448 = vmatprep.subr.mxu0 %v172
  %449 = vmatpush1.msra.mxu0 %v171
  %450 = vmatprep.subr.mxu0 %v170
  %451 = vmatpush1.msra.mxu0 %v169
  %452 = vmatprep.subr.mxu0 %v168
  %453 = vmatpush1.msra.mxu0 %v167
  %454 = vmatprep.subr.mxu0 %v166
  %455 = vmatpush1.msra.mxu0 %v165
  %456 = vmatprep.subr.mxu0 %v164
  %457 = vmatpush1.msra.mxu0 %v163
  %458 = vmatprep.subr.mxu0 %v162
  %459 = vmatpush1.msra.mxu0 %v161
  %460 = vmatprep.subr.mxu0 0.0
  %461 = vmatpush2.msra.mxu0 0.0
  %462 = vmatprep.subr.mxu0 0.0
  %463 = vmatpush2.msra.mxu0 0.0
  %464 = vmatprep.subr.mxu0 0.0
  %465 = vmatpush2.msra.mxu0 0.0
  %466 = vmatprep.subr.mxu0 0.0
  %467 = vmatpush2.msra.mxu0 0.0
  %468 = vmatprep.subr.mxu0 0.0
  %469 = vmatpush2.msra.mxu0 0.0
  %470 = vmatprep.subr.mxu0 0.0
  %471 = vmatpush2.msra.mxu0 0.0
  %472 = vmatprep.subr.mxu0 0.0
  %473 = vmatpush2.msra.mxu0 0.0
  %474 = vmatprep.subr.mxu0 0.0
  %475 = vmatpush2.msra.mxu0 0.0
  %476 = vmatprep.subr.mxu0 0.0
  %477 = vmatpush2.msra.mxu0 0.0
  %478 = vmatprep.subr.mxu0 0.0
  %479 = vmatpush2.msra.mxu0 0.0
  %480 = vmatprep.subr.mxu0 0.0
  %481 = vmatpush2.msra.mxu0 0.0
  %482 = vmatprep.subr.mxu0 0.0
  %483 = vmatpush2.msra.mxu0 0.0
  %484 = vmatprep.subr.mxu0 0.0
  %485 = vmatpush2.msra.mxu0 0.0
  %486 = vmatprep.subr.mxu0 0.0
  %487 = vmatpush2.msra.mxu0 0.0
  %488 = vmatprep.subr.mxu0 0.0
  %489 = vmatpush2.msra.mxu0 0.0
  %490 = vmatprep.subr.mxu0 0.0
  %491 = vmatpush2.msra.mxu0 0.0
  %492 = vmatprep.mubr.f32.mxu0 0.0
  %493 = vmatmul.mubr.f32.gmra.mxu0 %v426
  %v494 = vpop.f32.mrf.mxu0
  %v495 = vadd.f32 %v423, %v494
  %v496 = vpop.f32.mrf.mxu0
  %v497 = vadd.f32 %v424, %v496
  %498 = vdwg.mxu0
  %v499 = vxor.u32 %v495, 2147483648
  %v500 = vmul.f32 %v499, 1.442695
  %v501 = vpow.pop %v500
  %v502 = vadd.f32 %v501, 1.0
  %v503 = vrcp.pop %v502
  %v504 = vmul.f32 1.0, %v503
  %v505 = vtanh.pop %v497
  %v506 = vsub.f32 1.0, %v504
  %v507 = vmul.f32 %v506, %v419
  %v508 = vmul.f32 %v504, %v505
  %v509 = vadd.f32 %v507, %v508
  %v510 = vtanh.pop %v509
  %512 = vrot.lane.b32.xlu0 %v504, 96
  %v513 = vpop.permute.xlu0 %512
  %v515 = vmul.f32 %v510, %v513
  %516 = vrot.lane.b32.xlu0 %v419, 32
  %v517 = vpop.permute.xlu0 %516
  %v519 = vmul.f32 %v506, %v517
  %521 = vrot.lane.b32.xlu0 %v505, 32
  %v522 = vpop.permute.xlu0 %521
  %v524 = vmul.f32 %v504, %v522
  %v525 = vadd.f32 %v519, %v524
  %v526 = vtanh.pop %v525
  %v527 = vmul.f32 %v526, %v513
  %529 = vrot.lane.b32.xlu0 %v527, 96
  %v530 = vpop.permute.xlu0 %529
  %v532 = vsel %vm285, %v515, %v530
  %s533 = scalar_lea.vmem %s2, 16
  %534 = vst.msk [vmem:[%s533] sm:$0xff] %vm149, %v532
  %v535 = vrot.slane %v527, 6
  %v537 = vsel %vm290, %v535, %v535
  %539 = vrot.lane.b32.xlu0 %v537, 96
  %v540 = vpop.permute.xlu0 %539
  %v542 = vsel %vm285, %v515, %v540
  %s543 = smul.u32 3, 2
  %s544 = smul.addr %s543, 8
  %s545 = scalar_lea.vmem [#allocation2], %s544
  %v546 = vld [vmem:[%s545] sm:$0xff]
  %v547 = vld [vmem:[%s545 + $0x8] sm:$0xff]
  %v549 = vsel %vm149, %v542, 0
  %551 = vmatprep.subr.mxu0 0.0
  %552 = vmatpush1.msra.mxu0 0.0
  %553 = vmatprep.subr.mxu0 0.0
  %554 = vmatpush1.msra.mxu0 0.0
  %555 = vmatprep.subr.mxu0 0.0
  %556 = vmatpush1.msra.mxu0 0.0
  %557 = vmatprep.subr.mxu0 0.0
  %558 = vmatpush1.msra.mxu0 0.0
  %559 = vmatprep.subr.mxu0 0.0
  %560 = vmatpush1.msra.mxu0 0.0
  %561 = vmatprep.subr.mxu0 0.0
  %562 = vmatpush1.msra.mxu0 0.0
  %563 = vmatprep.subr.mxu0 0.0
  %564 = vmatpush1.msra.mxu0 0.0
  %565 = vmatprep.subr.mxu0 0.0
  %566 = vmatpush1.msra.mxu0 0.0
  %567 = vmatprep.subr.mxu0 %v176
  %568 = vmatpush1.msra.mxu0 %v175
  %569 = vmatprep.subr.mxu0 %v174
  %570 = vmatpush1.msra.mxu0 %v173
  %571 = vmatprep.subr.mxu0 %v172
  %572 = vmatpush1.msra.mxu0 %v171
  %573 = vmatprep.subr.mxu0 %v170
  %574 = vmatpush1.msra.mxu0 %v169
  %575 = vmatprep.subr.mxu0 %v168
  %576 = vmatpush1.msra.mxu0 %v167
  %577 = vmatprep.subr.mxu0 %v166
  %578 = vmatpush1.msra.mxu0 %v165
  %579 = vmatprep.subr.mxu0 %v164
  %580 = vmatpush1.msra.mxu0 %v163
  %581 = vmatprep.subr.mxu0 %v162
  %582 = vmatpush1.msra.mxu0 %v161
  %583 = vmatprep.subr.mxu0 0.0
  %584 = vmatpush2.msra.mxu0 0.0
  %585 = vmatprep.subr.mxu0 0.0
  %586 = vmatpush2.msra.mxu0 0.0
  %587 = vmatprep.subr.mxu0 0.0
  %588 = vmatpush2.msra.mxu0 0.0
  %589 = vmatprep.subr.mxu0 0.0
  %590 = vmatpush2.msra.mxu0 0.0
  %591 = vmatprep.subr.mxu0 0.0
  %592 = vmatpush2.msra.mxu0 0.0
  %593 = vmatprep.subr.mxu0 0.0
  %594 = vmatpush2.msra.mxu0 0.0
  %595 = vmatprep.subr.mxu0 0.0
  %596 = vmatpush2.msra.mxu0 0.0
  %597 = vmatprep.subr.mxu0 0.0
  %598 = vmatpush2.msra.mxu0 0.0
  %599 = vmatprep.subr.mxu0 0.0
  %600 = vmatpush2.msra.mxu0 0.0
  %601 = vmatprep.subr.mxu0 0.0
  %602 = vmatpush2.msra.mxu0 0.0
  %603 = vmatprep.subr.mxu0 0.0
  %604 = vmatpush2.msra.mxu0 0.0
  %605 = vmatprep.subr.mxu0 0.0
  %606 = vmatpush2.msra.mxu0 0.0
  %607 = vmatprep.subr.mxu0 0.0
  %608 = vmatpush2.msra.mxu0 0.0
  %609 = vmatprep.subr.mxu0 0.0
  %610 = vmatpush2.msra.mxu0 0.0
  %611 = vmatprep.subr.mxu0 0.0
  %612 = vmatpush2.msra.mxu0 0.0
  %613 = vmatprep.subr.mxu0 0.0
  %614 = vmatpush2.msra.mxu0 0.0
  %615 = vmatprep.mubr.f32.mxu0 0.0
  %616 = vmatmul.mubr.f32.gmra.mxu0 %v549
  %v617 = vpop.f32.mrf.mxu0
  %v618 = vadd.f32 %v546, %v617
  %v619 = vpop.f32.mrf.mxu0
  %v620 = vadd.f32 %v547, %v619
  %621 = vdwg.mxu0
  %v622 = vxor.u32 %v618, 2147483648
  %v623 = vmul.f32 %v622, 1.442695
  %v624 = vpow.pop %v623
  %v625 = vadd.f32 %v624, 1.0
  %v626 = vrcp.pop %v625
  %v627 = vmul.f32 1.0, %v626
  %v628 = vtanh.pop %v620
  %v629 = vsub.f32 1.0, %v627
  %v630 = vmul.f32 %v629, %v542
  %v631 = vmul.f32 %v627, %v628
  %v632 = vadd.f32 %v630, %v631
  %v633 = vtanh.pop %v632
  %635 = vrot.lane.b32.xlu0 %v627, 96
  %v636 = vpop.permute.xlu0 %635
  %v638 = vmul.f32 %v633, %v636
  %639 = vrot.lane.b32.xlu0 %v542, 32
  %v640 = vpop.permute.xlu0 %639
  %v642 = vmul.f32 %v629, %v640
  %644 = vrot.lane.b32.xlu0 %v628, 32
  %v645 = vpop.permute.xlu0 %644
  %v647 = vmul.f32 %v627, %v645
  %v648 = vadd.f32 %v642, %v647
  %v649 = vtanh.pop %v648
  %v650 = vmul.f32 %v649, %v636
  %652 = vrot.lane.b32.xlu0 %v650, 96
  %v653 = vpop.permute.xlu0 %652
  %v655 = vsel %vm285, %v638, %v653
  %s656 = scalar_lea.vmem %s2, 24
  %657 = vst.msk [vmem:[%s656] sm:$0xff] %vm149, %v655
  %v658 = vrot.slane %v650, 6
  %v660 = vsel %vm290, %v658, %v658
  %662 = vrot.lane.b32.xlu0 %v660, 96
  %v663 = vpop.permute.xlu0 %662
  %v665 = vsel %vm285, %v638, %v663
  %s666 = smul.u32 4, 2
  %s667 = smul.addr %s666, 8
  %s668 = scalar_lea.vmem [#allocation2], %s667
  %v669 = vld [vmem:[%s668] sm:$0xff]
  %v670 = vld [vmem:[%s668 + $0x8] sm:$0xff]
  %v672 = vsel %vm149, %v665, 0
  %674 = vmatprep.subr.mxu0 0.0
  %675 = vmatpush1.msra.mxu0 0.0
  %676 = vmatprep.subr.mxu0 0.0
  %677 = vmatpush1.msra.mxu0 0.0
  %678 = vmatprep.subr.mxu0 0.0
  %679 = vmatpush1.msra.mxu0 0.0
  %680 = vmatprep.subr.mxu0 0.0
  %681 = vmatpush1.msra.mxu0 0.0
  %682 = vmatprep.subr.mxu0 0.0
  %683 = vmatpush1.msra.mxu0 0.0
  %684 = vmatprep.subr.mxu0 0.0
  %685 = vmatpush1.msra.mxu0 0.0
  %686 = vmatprep.subr.mxu0 0.0
  %687 = vmatpush1.msra.mxu0 0.0
  %688 = vmatprep.subr.mxu0 0.0
  %689 = vmatpush1.msra.mxu0 0.0
  %690 = vmatprep.subr.mxu0 %v176
  %691 = vmatpush1.msra.mxu0 %v175
  %692 = vmatprep.subr.mxu0 %v174
  %693 = vmatpush1.msra.mxu0 %v173
  %694 = vmatprep.subr.mxu0 %v172
  %695 = vmatpush1.msra.mxu0 %v171
  %696 = vmatprep.subr.mxu0 %v170
  %697 = vmatpush1.msra.mxu0 %v169
  %698 = vmatprep.subr.mxu0 %v168
  %699 = vmatpush1.msra.mxu0 %v167
  %700 = vmatprep.subr.mxu0 %v166
  %701 = vmatpush1.msra.mxu0 %v165
  %702 = vmatprep.subr.mxu0 %v164
  %703 = vmatpush1.msra.mxu0 %v163
  %704 = vmatprep.subr.mxu0 %v162
  %705 = vmatpush1.msra.mxu0 %v161
  %706 = vmatprep.subr.mxu0 0.0
  %707 = vmatpush2.msra.mxu0 0.0
  %708 = vmatprep.subr.mxu0 0.0
  %709 = vmatpush2.msra.mxu0 0.0
  %710 = vmatprep.subr.mxu0 0.0
  %711 = vmatpush2.msra.mxu0 0.0
  %712 = vmatprep.subr.mxu0 0.0
  %713 = vmatpush2.msra.mxu0 0.0
  %714 = vmatprep.subr.mxu0 0.0
  %715 = vmatpush2.msra.mxu0 0.0
  %716 = vmatprep.subr.mxu0 0.0
  %717 = vmatpush2.msra.mxu0 0.0
  %718 = vmatprep.subr.mxu0 0.0
  %719 = vmatpush2.msra.mxu0 0.0
  %720 = vmatprep.subr.mxu0 0.0
  %721 = vmatpush2.msra.mxu0 0.0
  %722 = vmatprep.subr.mxu0 0.0
  %723 = vmatpush2.msra.mxu0 0.0
  %724 = vmatprep.subr.mxu0 0.0
  %725 = vmatpush2.msra.mxu0 0.0
  %726 = vmatprep.subr.mxu0 0.0
  %727 = vmatpush2.msra.mxu0 0.0
  %728 = vmatprep.subr.mxu0 0.0
  %729 = vmatpush2.msra.mxu0 0.0
  %730 = vmatprep.subr.mxu0 0.0
  %731 = vmatpush2.msra.mxu0 0.0
  %732 = vmatprep.subr.mxu0 0.0
  %733 = vmatpush2.msra.mxu0 0.0
  %734 = vmatprep.subr.mxu0 0.0
  %735 = vmatpush2.msra.mxu0 0.0
  %736 = vmatprep.subr.mxu0 0.0
  %737 = vmatpush2.msra.mxu0 0.0
  %738 = vmatprep.mubr.f32.mxu0 0.0
  %739 = vmatmul.mubr.f32.gmra.mxu0 %v672
  %v740 = vpop.f32.mrf.mxu0
  %v741 = vadd.f32 %v669, %v740
  %v742 = vpop.f32.mrf.mxu0
  %v743 = vadd.f32 %v670, %v742
  %744 = vdwg.mxu0
  %v745 = vxor.u32 %v741, 2147483648
  %v746 = vmul.f32 %v745, 1.442695
  %v747 = vpow.pop %v746
  %v748 = vadd.f32 %v747, 1.0
  %v749 = vrcp.pop %v748
  %v750 = vmul.f32 1.0, %v749
  %v751 = vtanh.pop %v743
  %v752 = vsub.f32 1.0, %v750
  %v753 = vmul.f32 %v752, %v665
  %v754 = vmul.f32 %v750, %v751
  %v755 = vadd.f32 %v753, %v754
  %v756 = vtanh.pop %v755
  %758 = vrot.lane.b32.xlu0 %v750, 96
  %v759 = vpop.permute.xlu0 %758
  %v761 = vmul.f32 %v756, %v759
  %762 = vrot.lane.b32.xlu0 %v665, 32
  %v763 = vpop.permute.xlu0 %762
  %v765 = vmul.f32 %v752, %v763
  %767 = vrot.lane.b32.xlu0 %v751, 32
  %v768 = vpop.permute.xlu0 %767
  %v770 = vmul.f32 %v750, %v768
  %v771 = vadd.f32 %v765, %v770
  %v772 = vtanh.pop %v771
  %v773 = vmul.f32 %v772, %v759
  %775 = vrot.lane.b32.xlu0 %v773, 96
  %v776 = vpop.permute.xlu0 %775
  %v778 = vsel %vm285, %v761, %v776
  %s779 = scalar_lea.vmem %s2, 32
  %780 = vst.msk [vmem:[%s779] sm:$0xff] %vm149, %v778
  %v781 = vrot.slane %v773, 6
  %v783 = vsel %vm290, %v781, %v781
  %785 = vrot.lane.b32.xlu0 %v783, 96
  %v786 = vpop.permute.xlu0 %785
  %v788 = vsel %vm285, %v761, %v786
  %s789 = smul.u32 5, 2
  %s790 = smul.addr %s789, 8
  %s791 = scalar_lea.vmem [#allocation2], %s790
  %v792 = vld [vmem:[%s791] sm:$0xff]
  %v793 = vld [vmem:[%s791 + $0x8] sm:$0xff]
  %v795 = vsel %vm149, %v788, 0
  %797 = vmatprep.subr.mxu0 0.0
  %798 = vmatpush1.msra.mxu0 0.0
  %799 = vmatprep.subr.mxu0 0.0
  %800 = vmatpush1.msra.mxu0 0.0
  %801 = vmatprep.subr.mxu0 0.0
  %802 = vmatpush1.msra.mxu0 0.0
  %803 = vmatprep.subr.mxu0 0.0
  %804 = vmatpush1.msra.mxu0 0.0
  %805 = vmatprep.subr.mxu0 0.0
  %806 = vmatpush1.msra.mxu0 0.0
  %807 = vmatprep.subr.mxu0 0.0
  %808 = vmatpush1.msra.mxu0 0.0
  %809 = vmatprep.subr.mxu0 0.0
  %810 = vmatpush1.msra.mxu0 0.0
  %811 = vmatprep.subr.mxu0 0.0
  %812 = vmatpush1.msra.mxu0 0.0
  %813 = vmatprep.subr.mxu0 %v176
  %814 = vmatpush1.msra.mxu0 %v175
  %815 = vmatprep.subr.mxu0 %v174
  %816 = vmatpush1.msra.mxu0 %v173
  %817 = vmatprep.subr.mxu0 %v172
  %818 = vmatpush1.msra.mxu0 %v171
  %819 = vmatprep.subr.mxu0 %v170
  %820 = vmatpush1.msra.mxu0 %v169
  %821 = vmatprep.subr.mxu0 %v168
  %822 = vmatpush1.msra.mxu0 %v167
  %823 = vmatprep.subr.mxu0 %v166
  %824 = vmatpush1.msra.mxu0 %v165
  %825 = vmatprep.subr.mxu0 %v164
  %826 = vmatpush1.msra.mxu0 %v163
  %827 = vmatprep.subr.mxu0 %v162
  %828 = vmatpush1.msra.mxu0 %v161
  %829 = vmatprep.subr.mxu0 0.0
  %830 = vmatpush2.msra.mxu0 0.0
  %831 = vmatprep.subr.mxu0 0.0
  %832 = vmatpush2.msra.mxu0 0.0
  %833 = vmatprep.subr.mxu0 0.0
  %834 = vmatpush2.msra.mxu0 0.0
  %835 = vmatprep.subr.mxu0 0.0
  %836 = vmatpush2.msra.mxu0 0.0
  %837 = vmatprep.subr.mxu0 0.0
  %838 = vmatpush2.msra.mxu0 0.0
  %839 = vmatprep.subr.mxu0 0.0
  %840 = vmatpush2.msra.mxu0 0.0
  %841 = vmatprep.subr.mxu0 0.0
  %842 = vmatpush2.msra.mxu0 0.0
  %843 = vmatprep.subr.mxu0 0.0
  %844 = vmatpush2.msra.mxu0 0.0
  %845 = vmatprep.subr.mxu0 0.0
  %846 = vmatpush2.msra.mxu0 0.0
  %847 = vmatprep.subr.mxu0 0.0
  %848 = vmatpush2.msra.mxu0 0.0
  %849 = vmatprep.subr.mxu0 0.0
  %850 = vmatpush2.msra.mxu0 0.0
  %851 = vmatprep.subr.mxu0 0.0
  %852 = vmatpush2.msra.mxu0 0.0
  %853 = vmatprep.subr.mxu0 0.0
  %854 = vmatpush2.msra.mxu0 0.0
  %855 = vmatprep.subr.mxu0 0.0
  %856 = vmatpush2.msra.mxu0 0.0
  %857 = vmatprep.subr.mxu0 0.0
  %858 = vmatpush2.msra.mxu0 0.0
  %859 = vmatprep.subr.mxu0 0.0
  %860 = vmatpush2.msra.mxu0 0.0
  %861 = vmatprep.mubr.f32.mxu0 0.0
  %862 = vmatmul.mubr.f32.gmra.mxu0 %v795
  %v863 = vpop.f32.mrf.mxu0
  %v864 = vadd.f32 %v792, %v863
  %v865 = vpop.f32.mrf.mxu0
  %v866 = vadd.f32 %v793, %v865
  %867 = vdwg.mxu0
  %v868 = vxor.u32 %v864, 2147483648
  %v869 = vmul.f32 %v868, 1.442695
  %v870 = vpow.pop %v869
  %v871 = vadd.f32 %v870, 1.0
  %v872 = vrcp.pop %v871
  %v873 = vmul.f32 1.0, %v872
  %v874 = vtanh.pop %v866
  %v875 = vsub.f32 1.0, %v873
  %v876 = vmul.f32 %v875, %v788
  %v877 = vmul.f32 %v873, %v874
  %v878 = vadd.f32 %v876, %v877
  %v879 = vtanh.pop %v878
  %881 = vrot.lane.b32.xlu0 %v873, 96
  %v882 = vpop.permute.xlu0 %881
  %v884 = vmul.f32 %v879, %v882
  %885 = vrot.lane.b32.xlu0 %v788, 32
  %v886 = vpop.permute.xlu0 %885
  %v888 = vmul.f32 %v875, %v886
  %890 = vrot.lane.b32.xlu0 %v874, 32
  %v891 = vpop.permute.xlu0 %890
  %v893 = vmul.f32 %v873, %v891
  %v894 = vadd.f32 %v888, %v893
  %v895 = vtanh.pop %v894
  %v896 = vmul.f32 %v895, %v882
  %898 = vrot.lane.b32.xlu0 %v896, 96
  %v899 = vpop.permute.xlu0 %898
  %v901 = vsel %vm285, %v884, %v899
  %s902 = scalar_lea.vmem %s2, 40
  %903 = vst.msk [vmem:[%s902] sm:$0xff] %vm149, %v901
  // Predicated region
  $region10: #{witran_encoder_forward.1} parent=0 // pred_check
    _
  $region11: #{witran_encoder_forward.1} parent=0 // pred_check_branch
    %905 = sbr.rel (0) target = $region13
  $region12: #{witran_encoder_forward.1} parent=0 // pred_region
    _
  $region13: #{witran_encoder_forward.1} parent=0 // pred_fallthru
    _
  // Predicated region
  $region14: #{witran_encoder_forward.1} parent=0 // pred_check
    _
  $region15: #{witran_encoder_forward.1} parent=0 // pred_check_branch
    %907 = sbr.rel (0) target = $region17
  $region16: #{witran_encoder_forward.1} parent=0 // pred_region
    _
  $region17: #{witran_encoder_forward.1} parent=0 // pred_fallthru
    _

</llo_original>
